<compile_context>
chip_gen: v5e
topology: v5e:2x2
jax: 0.10.0
libtpu: 0.0.40
codegen_flags: <defaults>
</compile_context>

<pallas_src>
import jax
import jax.numpy as jnp
from jax.experimental import pallas as pl
from jax.experimental.pallas import tpu as pltpu


def _round_up(a, m):
    return ((a + m - 1) // m) * m


def _vgae_encoder_kernel(
    x_ref,                      # [TM, HP]   f32  output of forward_graphcl
    w1_ref, b1_ref,             # [HP, 2HP] bf16, [1, 2HP] f32  fused layer-1 (mean|std)
    wm2_ref, bm2_ref,           # [HP, HP]  bf16, [1, HP]  f32  encoder_mean layer 2
    ws2_ref, bs2_ref,           # [HP, HP]  bf16, [1, HP]  f32  encoder_std  layer 2
    noise_ref,                  # [TM, HP]   f32  gaussian noise
    out_x_ref, out_mean_ref, out_std_ref,   # [TM, HP] f32
):
    hp = wm2_ref.shape[0]
    xt = x_ref[...].astype(w1_ref.dtype)

    # Fused first layer (mean | std): Linear -> ReLU
    h = jnp.dot(xt, w1_ref[...], preferred_element_type=jnp.float32) + b1_ref[...]
    h = jnp.maximum(h, 0.0)
    h_m = h[:, :hp].astype(wm2_ref.dtype)
    h_s = h[:, hp:].astype(ws2_ref.dtype)

    # encoder_mean second Linear
    x_mean = jnp.dot(h_m, wm2_ref[...],
                     preferred_element_type=jnp.float32) + bm2_ref[...]

    # encoder_std second Linear -> Softplus (numerically stable)
    z = jnp.dot(h_s, ws2_ref[...],
                preferred_element_type=jnp.float32) + bs2_ref[...]
    x_std = jnp.maximum(z, 0.0) + jnp.log1p(jnp.exp(-jnp.abs(z)))

    # Reparameterization: x = noise * std + mean
    out_x_ref[...] = (noise_ref[...] * x_std + x_mean).astype(out_x_ref.dtype)
    out_mean_ref[...] = x_mean.astype(out_mean_ref.dtype)
    out_std_ref[...] = x_std.astype(out_std_ref.dtype)


def vgae_encoder_forward(x, params, noise, *, row_tile=512,
                         dot_dtype=jnp.bfloat16):
    """x: [N, H] f32 (= forward_graphcl(adj)); params: dict; noise: [N, H] f32."""
    N, H = x.shape

    # Lane dim padded to a multiple of 128 (lane-dense MXU output / stores).
    HP = max(128, _round_up(H, 128))
    # Row tile: multiple of 8 (f32 sublane); 256/512 fills the v6e/v7x MXU.
    TM = max(8, min(_round_up(row_tile, 8), _round_up(N, 8)))
    NP = _round_up(N, TM)
    grid = (pl.cdiv(NP, TM),)

    def pad2(a, rows, cols, dtype=None):
        out = jnp.pad(a, ((0, rows - a.shape[0]), (0, cols - a.shape[1])))
        return out.astype(dtype) if dtype is not None else out

    # Fuse the two first-layer Linears into one [HP, 2*HP] weight (+ bias).
    w1 = jnp.concatenate(
        [pad2(params["wm1"], H, HP), pad2(params["ws1"], H, HP)], axis=1)
    w1 = pad2(w1, HP, 2 * HP, dot_dtype)                                # [HP, 2HP]
    b1 = jnp.concatenate(
        [pad2(params["bm1"], 1, HP), pad2(params["bs1"], 1, HP)], axis=1)  # [1, 2HP]
    wm2 = pad2(params["wm2"], HP, HP, dot_dtype)
    ws2 = pad2(params["ws2"], HP, HP, dot_dtype)
    bm2 = pad2(params["bm2"], 1, HP)
    bs2 = pad2(params["bs2"], 1, HP)

    x_p = pad2(x, NP, HP)
    noise_p = pad2(noise, NP, HP)

    row_spec = lambda: pl.BlockSpec((TM, HP), lambda i: (i, 0))
    resident = lambda shape: pl.BlockSpec(shape, lambda i: (0, 0))

    out_shapes = tuple(
        jax.ShapeDtypeStruct((NP, HP), jnp.float32) for _ in range(3))

    # VMEM budget: resident weights/biases + double-buffered row tiles.
    w_bytes = ((w1.size + wm2.size + ws2.size) * w1.dtype.itemsize
               + (b1.size + bm2.size + bs2.size) * 4)
    tile_bytes = TM * HP * 4 * (2 + 3)          # x, noise + 3 outputs (f32)
    vmem_limit = int(min(max(2 * (w_bytes + 2 * tile_bytes) + (2 << 20),
                             16 << 20), 64 << 20))

    cost = pl.CostEstimate(
        flops=8 * NP * HP * HP,                 # fused L1 (width 2HP) + two L2
        transcendentals=2 * NP * HP,            # exp + log1p in softplus
        bytes_accessed=int(5 * NP * HP * 4 + w_bytes),
    )

    out_x, out_mean, out_std = pl.pallas_call(
        _vgae_encoder_kernel,
        out_shape=out_shapes,
        grid_spec=pltpu.PrefetchScalarGridSpec(
            num_scalar_prefetch=0,
            grid=grid,
            in_specs=[
                row_spec(),                                     # x row tile
                resident((HP, 2 * HP)), resident((1, 2 * HP)),  # fused layer 1
                resident((HP, HP)), resident((1, HP)),          # mean layer 2
                resident((HP, HP)), resident((1, HP)),          # std layer 2
                row_spec(),                                     # noise row tile
            ],
            out_specs=[row_spec(), row_spec(), row_spec()],
        ),
        compiler_params=pltpu.CompilerParams(
            dimension_semantics=("parallel",),
            vmem_limit_bytes=vmem_limit),
        cost_estimate=cost,
    )(x_p, w1, b1, wm2, bm2, ws2, bs2, noise_p)

    return out_x[:N, :H], out_mean[:N, :H], out_std[:N, :H]


def init_params(key, hidden):
    """PyTorch Linear(h, h)-shaped params stored as [in, out] for x @ W + b."""
    ks = jax.random.split(key, 8)
    bound = 1.0 / float(jnp.sqrt(hidden))
    u = lambda k, shape: jax.random.uniform(
        k, shape, minval=-bound, maxval=bound, dtype=jnp.float32)
    return {
        "wm1": u(ks[0], (hidden, hidden)), "bm1": u(ks[1], (1, hidden)),
        "wm2": u(ks[2], (hidden, hidden)), "bm2": u(ks[3], (1, hidden)),
        "ws1": u(ks[4], (hidden, hidden)), "bs1": u(ks[5], (1, hidden)),
        "ws2": u(ks[6], (hidden, hidden)), "bs2": u(ks[7], (1, hidden)),
    }


def _reference(x, params, noise, dot_dtype=jnp.bfloat16):
    """Pure-JAX reference mirroring the kernel's bf16 matmul inputs."""
    cast = lambda a: a.astype(dot_dtype).astype(jnp.float32)
    relu = lambda v: jnp.maximum(v, 0.0)
    softplus = lambda v: jnp.maximum(v, 0.0) + jnp.log1p(jnp.exp(-jnp.abs(v)))
    h_m = relu(cast(x) @ cast(params["wm1"]) + params["bm1"])
    x_mean = cast(h_m) @ cast(params["wm2"]) + params["bm2"]
    h_s = relu(cast(x) @ cast(params["ws1"]) + params["bs1"])
    x_std = softplus(cast(h_s) @ cast(params["ws2"]) + params["bs2"])
    return noise * x_std + x_mean, x_mean, x_std


if __name__ == "__main__":
    N, HIDDEN = 8, 32  # small shapes: 8 nodes, dim_E = 32

    key = jax.random.PRNGKey(0)
    k_x, k_p, k_n = jax.random.split(key, 3)

    # x stands in for forward_graphcl(adj): [N, hidden]
    x = jax.random.normal(k_x, (N, HIDDEN), dtype=jnp.float32)
    params = init_params(k_p, HIDDEN)
    noise = jax.random.normal(k_n, (N, HIDDEN), dtype=jnp.float32)

    out_x, out_mean, out_std = vgae_encoder_forward(x, params, noise)
    jax.block_until_ready((out_x, out_mean, out_std))

    ref_x, ref_mean, ref_std = _reference(x, params, noise)
    assert out_x.shape == (N, HIDDEN)
    assert jnp.allclose(out_mean, ref_mean, atol=1e-2, rtol=1e-2)
    assert jnp.allclose(out_std, ref_std, atol=1e-2, rtol=1e-2)
    assert jnp.allclose(out_x, ref_x, atol=1e-2, rtol=1e-2)

    print("KERNEL_OK")
</pallas_src>

<mosaic_0001>
module attributes {stable_mosaic.version = 11 : i64} {
  func.func @_vgae_encoder_kernel(%arg0: i32, %arg1: memref<8x128xf32, #tpu.memory_space<vmem>>, %arg2: memref<128x256xbf16, #tpu.memory_space<vmem>>, %arg3: memref<1x256xf32, #tpu.memory_space<vmem>>, %arg4: memref<128x128xbf16, #tpu.memory_space<vmem>>, %arg5: memref<1x128xf32, #tpu.memory_space<vmem>>, %arg6: memref<128x128xbf16, #tpu.memory_space<vmem>>, %arg7: memref<1x128xf32, #tpu.memory_space<vmem>>, %arg8: memref<8x128xf32, #tpu.memory_space<vmem>>, %arg9: memref<8x128xf32, #tpu.memory_space<vmem>>, %arg10: memref<8x128xf32, #tpu.memory_space<vmem>>, %arg11: memref<8x128xf32, #tpu.memory_space<vmem>>) attributes {dimension_semantics = [#tpu.dimension_semantics<parallel>], iteration_bounds = array<i64: 1>, scalar_prefetch = 0 : i64, scratch_operands = 0 : i64, tpu.core_type = #tpu.core_type<tc>, window_params = [{transform_indices = @transform_0, window_bounds = array<i64: 8, 128>}, {pipeline_mode = #tpu.pipeline_mode<synchronous>, transform_indices = @transform_1, window_bounds = array<i64: 128, 256>}, {pipeline_mode = #tpu.pipeline_mode<synchronous>, transform_indices = @transform_2, window_bounds = array<i64: 1, 256>}, {pipeline_mode = #tpu.pipeline_mode<synchronous>, transform_indices = @transform_3, window_bounds = array<i64: 128, 128>}, {pipeline_mode = #tpu.pipeline_mode<synchronous>, transform_indices = @transform_4, window_bounds = array<i64: 1, 128>}, {pipeline_mode = #tpu.pipeline_mode<synchronous>, transform_indices = @transform_5, window_bounds = array<i64: 128, 128>}, {pipeline_mode = #tpu.pipeline_mode<synchronous>, transform_indices = @transform_6, window_bounds = array<i64: 1, 128>}, {transform_indices = @transform_7, window_bounds = array<i64: 8, 128>}, {transform_indices = @transform_8, window_bounds = array<i64: 8, 128>}, {transform_indices = @transform_9, window_bounds = array<i64: 8, 128>}, {transform_indices = @transform_10, window_bounds = array<i64: 8, 128>}]} {
    %c0 = arith.constant 0 : index
    %c0_0 = arith.constant 0 : index
    %0 = vector.load %arg1[%c0, %c0_0] : memref<8x128xf32, #tpu.memory_space<vmem>>, vector<8x128xf32>
    %1 = arith.truncf %0 : vector<8x128xf32> to vector<8x128xbf16>
    %c0_1 = arith.constant 0 : index
    %c0_2 = arith.constant 0 : index
    %2 = vector.load %arg2[%c0_1, %c0_2] : memref<128x256xbf16, #tpu.memory_space<vmem>>, vector<128x256xbf16>
    %cst = arith.constant dense<0.000000e+00> : vector<8x256xf32>
    %3 = tpu.matmul %1, %2, %cst {dimension_numbers = #tpu.dot_dimension_numbers<[1], [0], [0], [1], [0, 0, 1, 1], [], []>} : vector<8x128xbf16>, vector<128x256xbf16>, vector<8x256xf32> -> vector<8x256xf32>
    %c0_3 = arith.constant 0 : index
    %c0_4 = arith.constant 0 : index
    %4 = vector.load %arg3[%c0_3, %c0_4] : memref<1x256xf32, #tpu.memory_space<vmem>>, vector<1x256xf32>
    %5 = vector.broadcast %4 : vector<1x256xf32> to vector<8x256xf32>
    %6 = arith.addf %3, %5 : vector<8x256xf32>
    %cst_5 = arith.constant 0.000000e+00 : f32
    %7 = vector.broadcast %cst_5 : f32 to vector<8x256xf32>
    %8 = arith.maximumf %6, %7 : vector<8x256xf32>
    %9 = vector.extract_strided_slice %8 {offsets = [0, 0], sizes = [8, 128], strides = [1, 1]} : vector<8x256xf32> to vector<8x128xf32>
    %10 = arith.truncf %9 : vector<8x128xf32> to vector<8x128xbf16>
    %11 = vector.extract_strided_slice %8 {offsets = [0, 128], sizes = [8, 128], strides = [1, 1]} : vector<8x256xf32> to vector<8x128xf32>
    %12 = arith.truncf %11 : vector<8x128xf32> to vector<8x128xbf16>
    %c0_6 = arith.constant 0 : index
    %c0_7 = arith.constant 0 : index
    %13 = vector.load %arg4[%c0_6, %c0_7] : memref<128x128xbf16, #tpu.memory_space<vmem>>, vector<128x128xbf16>
    %cst_8 = arith.constant dense<0.000000e+00> : vector<8x128xf32>
    %14 = tpu.matmul %10, %13, %cst_8 {dimension_numbers = #tpu.dot_dimension_numbers<[1], [0], [0], [1], [0, 0, 1, 1], [], []>} : vector<8x128xbf16>, vector<128x128xbf16>, vector<8x128xf32> -> vector<8x128xf32>
    %c0_9 = arith.constant 0 : index
    %c0_10 = arith.constant 0 : index
    %15 = vector.load %arg5[%c0_9, %c0_10] : memref<1x128xf32, #tpu.memory_space<vmem>>, vector<1x128xf32>
    %16 = vector.broadcast %15 : vector<1x128xf32> to vector<8x128xf32>
    %17 = arith.addf %14, %16 : vector<8x128xf32>
    %c0_11 = arith.constant 0 : index
    %c0_12 = arith.constant 0 : index
    %18 = vector.load %arg6[%c0_11, %c0_12] : memref<128x128xbf16, #tpu.memory_space<vmem>>, vector<128x128xbf16>
    %cst_13 = arith.constant dense<0.000000e+00> : vector<8x128xf32>
    %19 = tpu.matmul %12, %18, %cst_13 {dimension_numbers = #tpu.dot_dimension_numbers<[1], [0], [0], [1], [0, 0, 1, 1], [], []>} : vector<8x128xbf16>, vector<128x128xbf16>, vector<8x128xf32> -> vector<8x128xf32>
    %c0_14 = arith.constant 0 : index
    %c0_15 = arith.constant 0 : index
    %20 = vector.load %arg7[%c0_14, %c0_15] : memref<1x128xf32, #tpu.memory_space<vmem>>, vector<1x128xf32>
    %21 = vector.broadcast %20 : vector<1x128xf32> to vector<8x128xf32>
    %22 = arith.addf %19, %21 : vector<8x128xf32>
    %cst_16 = arith.constant 0.000000e+00 : f32
    %23 = vector.broadcast %cst_16 : f32 to vector<8x128xf32>
    %24 = arith.maximumf %22, %23 : vector<8x128xf32>
    %25 = math.absf %22 : vector<8x128xf32>
    %cst_17 = arith.constant 0.000000e+00 : f32
    %26 = vector.broadcast %cst_17 : f32 to vector<8x128xf32>
    %27 = arith.subf %26, %25 : vector<8x128xf32>
    %28 = math.exp %27 : vector<8x128xf32>
    %29 = math.log1p %28 : vector<8x128xf32>
    %30 = arith.addf %24, %29 : vector<8x128xf32>
    %c0_18 = arith.constant 0 : index
    %c0_19 = arith.constant 0 : index
    %31 = vector.load %arg8[%c0_18, %c0_19] : memref<8x128xf32, #tpu.memory_space<vmem>>, vector<8x128xf32>
    %32 = arith.mulf %31, %30 : vector<8x128xf32>
    %33 = arith.addf %32, %17 : vector<8x128xf32>
    %c0_20 = arith.constant 0 : index
    %c0_21 = arith.constant 0 : index
    %34 = vector.load %arg9[%c0_20, %c0_21] : memref<8x128xf32, #tpu.memory_space<vmem>>, vector<8x128xf32>
    tpu.vector_store %arg9[%c0_20, %c0_21], %33 {strides = array<i32>} : memref<8x128xf32, #tpu.memory_space<vmem>>, vector<8x128xf32>,
    %c0_22 = arith.constant 0 : index
    %c0_23 = arith.constant 0 : index
    %35 = vector.load %arg10[%c0_22, %c0_23] : memref<8x128xf32, #tpu.memory_space<vmem>>, vector<8x128xf32>
    tpu.vector_store %arg10[%c0_22, %c0_23], %17 {strides = array<i32>} : memref<8x128xf32, #tpu.memory_space<vmem>>, vector<8x128xf32>,
    %c0_24 = arith.constant 0 : index
    %c0_25 = arith.constant 0 : index
    %36 = vector.load %arg11[%c0_24, %c0_25] : memref<8x128xf32, #tpu.memory_space<vmem>>, vector<8x128xf32>
    tpu.vector_store %arg11[%c0_24, %c0_25], %30 {strides = array<i32>} : memref<8x128xf32, #tpu.memory_space<vmem>>, vector<8x128xf32>,
    return
  }
  func.func @transform_0(%arg0: i32) -> (i32, i32) {
    %c0_i32 = arith.constant 0 : i32
    %c0_i32_0 = arith.constant 0 : i32
    return %arg0, %c0_i32 : i32, i32
  }
  func.func @transform_1(%arg0: i32) -> (i32, i32) {
    %c0_i32 = arith.constant 0 : i32
    %c0_i32_0 = arith.constant 0 : i32
    %c0_i32_1 = arith.constant 0 : i32
    return %c0_i32, %c0_i32_0 : i32, i32
  }
  func.func @transform_2(%arg0: i32) -> (i32, i32) {
    %c0_i32 = arith.constant 0 : i32
    %c0_i32_0 = arith.constant 0 : i32
    %c0_i32_1 = arith.constant 0 : i32
    return %c0_i32, %c0_i32_0 : i32, i32
  }
  func.func @transform_3(%arg0: i32) -> (i32, i32) {
    %c0_i32 = arith.constant 0 : i32
    %c0_i32_0 = arith.constant 0 : i32
    %c0_i32_1 = arith.constant 0 : i32
    return %c0_i32, %c0_i32_0 : i32, i32
  }
  func.func @transform_4(%arg0: i32) -> (i32, i32) {
    %c0_i32 = arith.constant 0 : i32
    %c0_i32_0 = arith.constant 0 : i32
    %c0_i32_1 = arith.constant 0 : i32
    return %c0_i32, %c0_i32_0 : i32, i32
  }
  func.func @transform_5(%arg0: i32) -> (i32, i32) {
    %c0_i32 = arith.constant 0 : i32
    %c0_i32_0 = arith.constant 0 : i32
    %c0_i32_1 = arith.constant 0 : i32
    return %c0_i32, %c0_i32_0 : i32, i32
  }
  func.func @transform_6(%arg0: i32) -> (i32, i32) {
    %c0_i32 = arith.constant 0 : i32
    %c0_i32_0 = arith.constant 0 : i32
    %c0_i32_1 = arith.constant 0 : i32
    return %c0_i32, %c0_i32_0 : i32, i32
  }
  func.func @transform_7(%arg0: i32) -> (i32, i32) {
    %c0_i32 = arith.constant 0 : i32
    %c0_i32_0 = arith.constant 0 : i32
    return %arg0, %c0_i32 : i32, i32
  }
  func.func @transform_8(%arg0: i32) -> (i32, i32) {
    %c0_i32 = arith.constant 0 : i32
    %c0_i32_0 = arith.constant 0 : i32
    return %arg0, %c0_i32 : i32, i32
  }
  func.func @transform_9(%arg0: i32) -> (i32, i32) {
    %c0_i32 = arith.constant 0 : i32
    %c0_i32_0 = arith.constant 0 : i32
    return %arg0, %c0_i32 : i32, i32
  }
  func.func @transform_10(%arg0: i32) -> (i32, i32) {
    %c0_i32 = arith.constant 0 : i32
    %c0_i32_0 = arith.constant 0 : i32
    return %arg0, %c0_i32 : i32, i32
  }
}

</mosaic_0001>

<llo_original>
// kernel: tpu_custom_call.1
$region0: #{tpu_custom_call.1}
  #allocation0 [shape = 'u32[]', space=smem, size = 0x4, offset = 0x4, fixed_abs, tag = 'smem constant byte address 0x4 - core index']
  #allocation1 [shape = 'u32[72,128]{1,0:T(1,128)}', space=vmem, size = 0x9000, scoped, tag = 'internal scratch']
  %s0 = inlined_call_operand.hbm [shape: f32[8,128], index: 0, kind: input, shape index: {}]
  %s1 = inlined_call_operand.hbm [shape: bf16[128,256], index: 1, kind: input, shape index: {}]
  %s2 = inlined_call_operand.hbm [shape: f32[1,256], index: 2, kind: input, shape index: {}]
  %s3 = inlined_call_operand.hbm [shape: bf16[128,128], index: 3, kind: input, shape index: {}]
  %s4 = inlined_call_operand.vmem [shape: f32[1,128], index: 4, kind: input, shape index: {}]
  %s5 = inlined_call_operand.hbm [shape: bf16[128,128], index: 5, kind: input, shape index: {}]
  %s6 = inlined_call_operand.vmem [shape: f32[1,128], index: 6, kind: input, shape index: {}]
  %s7 = inlined_call_operand.hbm [shape: f32[8,128], index: 7, kind: input, shape index: {}]
  %s8 = inlined_call_operand.hbm [shape: f32[8,128], index: 8, kind: output, shape index: {0}]
  %s9 = inlined_call_operand.hbm [shape: f32[8,128], index: 9, kind: output, shape index: {1}]
  %s10 = inlined_call_operand.hbm [shape: f32[8,128], index: 10, kind: output, shape index: {2}]
  %11 = xla_tuple %s8, %s9, %s10
  %s12 = sld [smem:[#allocation0]]
  $region82: #{tpu_custom_call.1} parent=0
    _
  %s14 = ssub.s32 1, %s12
  %s15 = scalar_select 0, %s14, %s12
  $region1: #{tpu_custom_call.1} parent=0
    #allocation2 [shape = 'u8[4096]{0}', space=vmem, size = 0x1000, scoped, tag = 'input window, operand 0, single buffered']
    #allocation3 [shape = 's32[1]{0}', space=sflag, size = 0x4, scoped, tag = 'scoped memory for tpu_custom_call.1']
    #allocation4 [shape = 's32[1]{0}', space=sflag, size = 0x4, scoped, tag = 'scoped memory for tpu_custom_call.1']
    #allocation5 [shape = 'u8[65536]{0}', space=vmem, size = 0x10000, scoped, tag = 'input window, operand 1, single buffered']
    #allocation6 [shape = 's32[1]{0}', space=sflag, size = 0x4, scoped, tag = 'scoped memory for tpu_custom_call.1']
    #allocation7 [shape = 'u8[1024]{0}', space=vmem, size = 0x400, scoped, tag = 'input window, operand 2, single buffered']
    #allocation8 [shape = 'u8[32768]{0}', space=vmem, size = 0x8000, scoped, tag = 'input window, operand 3, single buffered']
    #allocation9 [shape = 's32[1]{0}', space=sflag, size = 0x4, scoped, tag = 'scoped memory for tpu_custom_call.1']
    #allocation10 [shape = 'u8[32768]{0}', space=vmem, size = 0x8000, scoped, tag = 'input window, operand 5, single buffered']
    #allocation11 [shape = 'u8[4096]{0}', space=vmem, size = 0x1000, scoped, tag = 'input window, operand 7, single buffered']
    #allocation12 [shape = 's32[1]{0}', space=sflag, size = 0x4, scoped, tag = 'scoped memory for tpu_custom_call.1']
    #allocation13 [shape = 'u8[4096]{0}', space=vmem, size = 0x1000, scoped, tag = 'output window, operand 0, single buffered']
    #allocation14 [shape = 'u8[4096]{0}', space=vmem, size = 0x1000, scoped, tag = 'output window, operand 1, single buffered']
    #allocation15 [shape = 's32[1]{0}', space=sflag, size = 0x4, scoped, tag = 'scoped memory for tpu_custom_call.1']
    #allocation16 [shape = 'u8[4096]{0}', space=vmem, size = 0x1000, scoped, tag = 'output window, operand 2, single buffered']
    %16 = vsyncpa [#allocation3], 0
    %17 = vsyncpa [#allocation6], 0
    %18 = vsyncpa [#allocation9], 0
    %19 = vsyncpa [#allocation12], 0
    %20 = vsyncpa [#allocation4], 0
    %21 = vsyncpa [#allocation15], 0
    // Predicated region
    $region2: #{tpu_custom_call.1} parent=1 // pred_check
      _
    $region3: #{tpu_custom_call.1} parent=1 // pred_check_branch
      %23 = sbr.rel (0) target = $region5
    $region4: #{tpu_custom_call.1} parent=1 // pred_region
      %25 = vsyncadd [#allocation3], 0
      %s27 = sshll.u32 %s0, 4
      %s28 = int_to_ptr.hbm [resolvable:$true] %s27
      %s29 = sshll.u32 [#allocation2], 4
      %s30 = int_to_ptr.vmem [resolvable:$true] %s29
      %32 = dma.hbm_to_vmem [thread:$0]  %s28, 128, %s30, [#allocation3]
    $region5: #{tpu_custom_call.1} parent=1 // pred_fallthru
      _
    // Predicated region
    $region6: #{tpu_custom_call.1} parent=1 // pred_check
      _
    $region7: #{tpu_custom_call.1} parent=1 // pred_check_branch
      %34 = sbr.rel (0) target = $region9
    $region8: #{tpu_custom_call.1} parent=1 // pred_region
      %36 = vsyncadd [#allocation6], 0
      %s37 = sshll.u32 %s1, 4
      %s38 = int_to_ptr.hbm [resolvable:$true] %s37
      %s39 = sshll.u32 [#allocation5], 4
      %s40 = int_to_ptr.vmem [resolvable:$true] %s39
      %45 = dma.hbm_to_vmem [thread:$0]  %s38, 2048, %s40, [#allocation6], 128, 128, 8
    $region9: #{tpu_custom_call.1} parent=1 // pred_fallthru
      _
    // Predicated region
    $region10: #{tpu_custom_call.1} parent=1 // pred_check
      _
    $region11: #{tpu_custom_call.1} parent=1 // pred_check_branch
      %47 = sbr.rel (0) target = $region13
    $region12: #{tpu_custom_call.1} parent=1 // pred_region
      %49 = vsyncadd [#allocation6], 0
      %s51 = sshll.u32 %s2, 4
      %s52 = int_to_ptr.hbm [resolvable:$true] %s51
      %s53 = sshll.u32 [#allocation7], 4
      %s54 = int_to_ptr.vmem [resolvable:$true] %s53
      %56 = dma.hbm_to_vmem [thread:$0]  %s52, 32, %s54, [#allocation6]
    $region13: #{tpu_custom_call.1} parent=1 // pred_fallthru
      _
    // Predicated region
    $region14: #{tpu_custom_call.1} parent=1 // pred_check
      _
    $region15: #{tpu_custom_call.1} parent=1 // pred_check_branch
      %58 = sbr.rel (0) target = $region17
    $region16: #{tpu_custom_call.1} parent=1 // pred_region
      %60 = vsyncadd [#allocation9], 0
      %s61 = sshll.u32 %s3, 4
      %s62 = int_to_ptr.hbm [resolvable:$true] %s61
      %s63 = sshll.u32 [#allocation8], 4
      %s64 = int_to_ptr.vmem [resolvable:$true] %s63
      %69 = dma.hbm_to_vmem [thread:$0]  %s62, 1024, %s64, [#allocation9], 64, 64, 4
    $region17: #{tpu_custom_call.1} parent=1 // pred_fallthru
      _
    // Predicated region
    $region18: #{tpu_custom_call.1} parent=1 // pred_check
      _
    $region19: #{tpu_custom_call.1} parent=1 // pred_check_branch
      %71 = sbr.rel (0) target = $region21
    $region20: #{tpu_custom_call.1} parent=1 // pred_region
      _
    $region21: #{tpu_custom_call.1} parent=1 // pred_fallthru
      _
    // Predicated region
    $region22: #{tpu_custom_call.1} parent=1 // pred_check
      _
    $region23: #{tpu_custom_call.1} parent=1 // pred_check_branch
      %73 = sbr.rel (0) target = $region25
    $region24: #{tpu_custom_call.1} parent=1 // pred_region
      %75 = vsyncadd [#allocation9], 0
      %s76 = sshll.u32 %s5, 4
      %s77 = int_to_ptr.hbm [resolvable:$true] %s76
      %s78 = sshll.u32 [#allocation10], 4
      %s79 = int_to_ptr.vmem [resolvable:$true] %s78
      %84 = dma.hbm_to_vmem [thread:$0]  %s77, 1024, %s79, [#allocation9], 64, 64, 4
    $region25: #{tpu_custom_call.1} parent=1 // pred_fallthru
      _
    // Predicated region
    $region26: #{tpu_custom_call.1} parent=1 // pred_check
      _
    $region27: #{tpu_custom_call.1} parent=1 // pred_check_branch
      %86 = sbr.rel (0) target = $region29
    $region28: #{tpu_custom_call.1} parent=1 // pred_region
      _
    $region29: #{tpu_custom_call.1} parent=1 // pred_fallthru
      _
    // Predicated region
    $region30: #{tpu_custom_call.1} parent=1 // pred_check
      _
    $region31: #{tpu_custom_call.1} parent=1 // pred_check_branch
      %88 = sbr.rel (0) target = $region33
    $region32: #{tpu_custom_call.1} parent=1 // pred_region
      %90 = vsyncadd [#allocation12], 0
      %s92 = sshll.u32 %s7, 4
      %s93 = int_to_ptr.hbm [resolvable:$true] %s92
      %s94 = sshll.u32 [#allocation11], 4
      %s95 = int_to_ptr.vmem [resolvable:$true] %s94
      %97 = dma.hbm_to_vmem [thread:$0]  %s93, 128, %s95, [#allocation12]
    $region33: #{tpu_custom_call.1} parent=1 // pred_fallthru
      _
    // Predicated region
    $region34: #{tpu_custom_call.1} parent=1 // pred_check
      _
    $region35: #{tpu_custom_call.1} parent=1 // pred_check_branch
      %99 = sbr.rel (0) target = $region37
    $region36: #{tpu_custom_call.1} parent=1 // pred_region
      %101 = dma.done [#allocation3], 128
    $region37: #{tpu_custom_call.1} parent=1 // pred_fallthru
      _
    // Predicated region
    $region38: #{tpu_custom_call.1} parent=1 // pred_check
      _
    $region39: #{tpu_custom_call.1} parent=1 // pred_check_branch
      %103 = sbr.rel (0) target = $region41
    $region40: #{tpu_custom_call.1} parent=1 // pred_region
      %105 = dma.done [#allocation6], 2048
    $region41: #{tpu_custom_call.1} parent=1 // pred_fallthru
      _
    // Predicated region
    $region42: #{tpu_custom_call.1} parent=1 // pred_check
      _
    $region43: #{tpu_custom_call.1} parent=1 // pred_check_branch
      %107 = sbr.rel (0) target = $region45
    $region44: #{tpu_custom_call.1} parent=1 // pred_region
      %109 = dma.done [#allocation6], 32
    $region45: #{tpu_custom_call.1} parent=1 // pred_fallthru
      _
    // Predicated region
    $region46: #{tpu_custom_call.1} parent=1 // pred_check
      _
    $region47: #{tpu_custom_call.1} parent=1 // pred_check_branch
      %111 = sbr.rel (0) target = $region49
    $region48: #{tpu_custom_call.1} parent=1 // pred_region
      %113 = dma.done [#allocation9], 1024
    $region49: #{tpu_custom_call.1} parent=1 // pred_fallthru
      _
    // Predicated region
    $region50: #{tpu_custom_call.1} parent=1 // pred_check
      _
    $region51: #{tpu_custom_call.1} parent=1 // pred_check_branch
      %115 = sbr.rel (0) target = $region53
    $region52: #{tpu_custom_call.1} parent=1 // pred_region
      %117 = dma.done [#allocation9], 1024
    $region53: #{tpu_custom_call.1} parent=1 // pred_fallthru
      _
    // Predicated region
    $region54: #{tpu_custom_call.1} parent=1 // pred_check
      _
    $region55: #{tpu_custom_call.1} parent=1 // pred_check_branch
      %119 = sbr.rel (0) target = $region57
    $region56: #{tpu_custom_call.1} parent=1 // pred_region
      %121 = dma.done [#allocation12], 128
    $region57: #{tpu_custom_call.1} parent=1 // pred_fallthru
      _
    %v122 = vld [vmem:[#allocation2] sm:$0xff]
    %v123 = vpack.c.bf16 %v122, %v122
    %v124 = vld [vmem:[#allocation5] sm:$0xff]
    %v125 = vld [vmem:[#allocation5 + $0x8] sm:$0xff]
    %v126 = vld [vmem:[#allocation5 + $0x10] sm:$0xff]
    %v127 = vld [vmem:[#allocation5 + $0x18] sm:$0xff]
    %v128 = vld [vmem:[#allocation5 + $0x20] sm:$0xff]
    %v129 = vld [vmem:[#allocation5 + $0x28] sm:$0xff]
    %v130 = vld [vmem:[#allocation5 + $0x30] sm:$0xff]
    %v131 = vld [vmem:[#allocation5 + $0x38] sm:$0xff]
    %v132 = vld [vmem:[#allocation5 + $0x40] sm:$0xff]
    %v133 = vld [vmem:[#allocation5 + $0x48] sm:$0xff]
    %v134 = vld [vmem:[#allocation5 + $0x50] sm:$0xff]
    %v135 = vld [vmem:[#allocation5 + $0x58] sm:$0xff]
    %v136 = vld [vmem:[#allocation5 + $0x60] sm:$0xff]
    %v137 = vld [vmem:[#allocation5 + $0x68] sm:$0xff]
    %v138 = vld [vmem:[#allocation5 + $0x70] sm:$0xff]
    %v139 = vld [vmem:[#allocation5 + $0x78] sm:$0xff]
    %v140 = vld [vmem:[#allocation7] sm:$0x3]
    %v142 = vperm.slane %v140, 0
    %v143 = vperm.slane %v140, 1
    %v162 = vunpack.c.l.b16 %v124
    %v163 = vunpack.c.h.b16 %v124
    %v164 = vunpack.c.l.b16 %v125
    %v165 = vunpack.c.h.b16 %v125
    %v166 = vunpack.c.l.b16 %v126
    %v167 = vunpack.c.h.b16 %v126
    %v168 = vunpack.c.l.b16 %v127
    %v169 = vunpack.c.h.b16 %v127
    %v170 = vunpack.c.l.b16 %v128
    %v171 = vunpack.c.h.b16 %v128
    %v172 = vunpack.c.l.b16 %v129
    %v173 = vunpack.c.h.b16 %v129
    %v174 = vunpack.c.l.b16 %v130
    %v175 = vunpack.c.h.b16 %v130
    %v176 = vunpack.c.l.b16 %v131
    %v177 = vunpack.c.h.b16 %v131
    %v178 = vunpack.c.l.b16 %v132
    %v179 = vunpack.c.h.b16 %v132
    %v180 = vunpack.c.l.b16 %v133
    %v181 = vunpack.c.h.b16 %v133
    %v182 = vunpack.c.l.b16 %v134
    %v183 = vunpack.c.h.b16 %v134
    %v184 = vunpack.c.l.b16 %v135
    %v185 = vunpack.c.h.b16 %v135
    %v186 = vunpack.c.l.b16 %v136
    %v187 = vunpack.c.h.b16 %v136
    %v188 = vunpack.c.l.b16 %v137
    %v189 = vunpack.c.h.b16 %v137
    %v190 = vunpack.c.l.b16 %v138
    %v191 = vunpack.c.h.b16 %v138
    %v192 = vunpack.c.l.b16 %v139
    %v193 = vunpack.c.h.b16 %v139
    %v194 = vpack.c.b16 %v164, %v162
    %v195 = vpack.c.b16 %v165, %v163
    %v196 = vpack.c.b16 %v168, %v166
    %v197 = vpack.c.b16 %v169, %v167
    %v198 = vpack.c.b16 %v172, %v170
    %v199 = vpack.c.b16 %v173, %v171
    %v200 = vpack.c.b16 %v176, %v174
    %v201 = vpack.c.b16 %v177, %v175
    %v202 = vpack.c.b16 %v180, %v178
    %v203 = vpack.c.b16 %v181, %v179
    %v204 = vpack.c.b16 %v184, %v182
    %v205 = vpack.c.b16 %v185, %v183
    %v206 = vpack.c.b16 %v188, %v186
    %v207 = vpack.c.b16 %v189, %v187
    %v208 = vpack.c.b16 %v192, %v190
    %v209 = vpack.c.b16 %v193, %v191
    %226 = vmatpush.bf16.msra.mxu0 %v208
    %227 = vmatpush.bf16.msra.mxu0 %v206
    %228 = vmatpush.bf16.msra.mxu0 %v204
    %229 = vmatpush.bf16.msra.mxu0 %v202
    %230 = vmatpush.bf16.msra.mxu0 %v200
    %231 = vmatpush.bf16.msra.mxu0 %v198
    %232 = vmatpush.bf16.msra.mxu0 %v196
    %233 = vmatpush.bf16.msra.mxu0 %v194
    %234 = vmatmul.bf16.gmra.mxu0 %v123
    %v235 = vpop.f32.mrf.mxu0
    %v236 = vadd.f32 %v142, %v235
    %v237 = vpop.f32.mrf.mxu0
    %238 = vdwg.mxu0
    %239 = vmatpush.bf16.msra.mxu0 %v209
    %240 = vmatpush.bf16.msra.mxu0 %v207
    %241 = vmatpush.bf16.msra.mxu0 %v205
    %242 = vmatpush.bf16.msra.mxu0 %v203
    %243 = vmatpush.bf16.msra.mxu0 %v201
    %244 = vmatpush.bf16.msra.mxu0 %v199
    %245 = vmatpush.bf16.msra.mxu0 %v197
    %246 = vmatpush.bf16.msra.mxu0 %v195
    %247 = vmatmul.bf16.gmra.mxu0 %v123
    %v248 = vpop.f32.mrf.mxu0
    %v249 = vadd.f32 %v143, %v248
    %v250 = vpop.f32.mrf.mxu0
    %251 = vdwg.mxu0
    %v252 = vmax.f32 %v236, 0.0
    %v253 = vmax.f32 %v249, 0.0
    %v254 = vpack.c.bf16 %v252, %v252
    %v255 = vpack.c.bf16 %v253, %v253
    %v256 = vld [vmem:[#allocation8] sm:$0xf]
    %v257 = vld [vmem:[#allocation8 + $0x4] sm:$0xf]
    %v258 = vld [vmem:[#allocation8 + $0x8] sm:$0xf]
    %v259 = vld [vmem:[#allocation8 + $0xc] sm:$0xf]
    %v260 = vld [vmem:[#allocation8 + $0x10] sm:$0xf]
    %v261 = vld [vmem:[#allocation8 + $0x14] sm:$0xf]
    %v262 = vld [vmem:[#allocation8 + $0x18] sm:$0xf]
    %v263 = vld [vmem:[#allocation8 + $0x1c] sm:$0xf]
    %v264 = vld [vmem:[#allocation8 + $0x20] sm:$0xf]
    %v265 = vld [vmem:[#allocation8 + $0x24] sm:$0xf]
    %v266 = vld [vmem:[#allocation8 + $0x28] sm:$0xf]
    %v267 = vld [vmem:[#allocation8 + $0x2c] sm:$0xf]
    %v268 = vld [vmem:[#allocation8 + $0x30] sm:$0xf]
    %v269 = vld [vmem:[#allocation8 + $0x34] sm:$0xf]
    %v270 = vld [vmem:[#allocation8 + $0x38] sm:$0xf]
    %v271 = vld [vmem:[#allocation8 + $0x3c] sm:$0xf]
    %v272 = vld [vmem:[%s4] sm:$0x1]
    %v274 = vperm.slane %v272, 0
    %v292 = vunpack.c.l.b16 %v256
    %v293 = vunpack.c.l.b16 %v257
    %v294 = vunpack.c.l.b16 %v258
    %v295 = vunpack.c.l.b16 %v259
    %v296 = vunpack.c.l.b16 %v260
    %v297 = vunpack.c.l.b16 %v261
    %v298 = vunpack.c.l.b16 %v262
    %v299 = vunpack.c.l.b16 %v263
    %v300 = vunpack.c.l.b16 %v264
    %v301 = vunpack.c.l.b16 %v265
    %v302 = vunpack.c.l.b16 %v266
    %v303 = vunpack.c.l.b16 %v267
    %v304 = vunpack.c.l.b16 %v268
    %v305 = vunpack.c.l.b16 %v269
    %v306 = vunpack.c.l.b16 %v270
    %v307 = vunpack.c.l.b16 %v271
    %v308 = vpack.c.b16 %v293, %v292
    %v309 = vpack.c.b16 %v295, %v294
    %v310 = vpack.c.b16 %v297, %v296
    %v311 = vpack.c.b16 %v299, %v298
    %v312 = vpack.c.b16 %v301, %v300
    %v313 = vpack.c.b16 %v303, %v302
    %v314 = vpack.c.b16 %v305, %v304
    %v315 = vpack.c.b16 %v307, %v306
    %324 = vmatpush.bf16.msra.mxu0 %v315
    %325 = vmatpush.bf16.msra.mxu0 %v314
    %326 = vmatpush.bf16.msra.mxu0 %v313
    %327 = vmatpush.bf16.msra.mxu0 %v312
    %328 = vmatpush.bf16.msra.mxu0 %v311
    %329 = vmatpush.bf16.msra.mxu0 %v310
    %330 = vmatpush.bf16.msra.mxu0 %v309
    %331 = vmatpush.bf16.msra.mxu0 %v308
    %332 = vmatmul.bf16.gmra.mxu0 %v254
    %v333 = vpop.f32.mrf.mxu0
    %v334 = vadd.f32 %v274, %v333
    %v335 = vpop.f32.mrf.mxu0
    %336 = vdwg.mxu0
    %v337 = vld [vmem:[#allocation10] sm:$0xf]
    %v338 = vld [vmem:[#allocation10 + $0x4] sm:$0xf]
    %v339 = vld [vmem:[#allocation10 + $0x8] sm:$0xf]
    %v340 = vld [vmem:[#allocation10 + $0xc] sm:$0xf]
    %v341 = vld [vmem:[#allocation10 + $0x10] sm:$0xf]
    %v342 = vld [vmem:[#allocation10 + $0x14] sm:$0xf]
    %v343 = vld [vmem:[#allocation10 + $0x18] sm:$0xf]
    %v344 = vld [vmem:[#allocation10 + $0x1c] sm:$0xf]
    %v345 = vld [vmem:[#allocation10 + $0x20] sm:$0xf]
    %v346 = vld [vmem:[#allocation10 + $0x24] sm:$0xf]
    %v347 = vld [vmem:[#allocation10 + $0x28] sm:$0xf]
    %v348 = vld [vmem:[#allocation10 + $0x2c] sm:$0xf]
    %v349 = vld [vmem:[#allocation10 + $0x30] sm:$0xf]
    %v350 = vld [vmem:[#allocation10 + $0x34] sm:$0xf]
    %v351 = vld [vmem:[#allocation10 + $0x38] sm:$0xf]
    %v352 = vld [vmem:[#allocation10 + $0x3c] sm:$0xf]
    %v353 = vld [vmem:[%s6] sm:$0x1]
    %v355 = vperm.slane %v353, 0
    %v373 = vunpack.c.l.b16 %v337
    %v374 = vunpack.c.l.b16 %v338
    %v375 = vunpack.c.l.b16 %v339
    %v376 = vunpack.c.l.b16 %v340
    %v377 = vunpack.c.l.b16 %v341
    %v378 = vunpack.c.l.b16 %v342
    %v379 = vunpack.c.l.b16 %v343
    %v380 = vunpack.c.l.b16 %v344
    %v381 = vunpack.c.l.b16 %v345
    %v382 = vunpack.c.l.b16 %v346
    %v383 = vunpack.c.l.b16 %v347
    %v384 = vunpack.c.l.b16 %v348
    %v385 = vunpack.c.l.b16 %v349
    %v386 = vunpack.c.l.b16 %v350
    %v387 = vunpack.c.l.b16 %v351
    %v388 = vunpack.c.l.b16 %v352
    %v389 = vpack.c.b16 %v374, %v373
    %v390 = vpack.c.b16 %v376, %v375
    %v391 = vpack.c.b16 %v378, %v377
    %v392 = vpack.c.b16 %v380, %v379
    %v393 = vpack.c.b16 %v382, %v381
    %v394 = vpack.c.b16 %v384, %v383
    %v395 = vpack.c.b16 %v386, %v385
    %v396 = vpack.c.b16 %v388, %v387
    %405 = vmatpush.bf16.msra.mxu0 %v396
    %406 = vmatpush.bf16.msra.mxu0 %v395
    %407 = vmatpush.bf16.msra.mxu0 %v394
    %408 = vmatpush.bf16.msra.mxu0 %v393
    %409 = vmatpush.bf16.msra.mxu0 %v392
    %410 = vmatpush.bf16.msra.mxu0 %v391
    %411 = vmatpush.bf16.msra.mxu0 %v390
    %412 = vmatpush.bf16.msra.mxu0 %v389
    %413 = vmatmul.bf16.gmra.mxu0 %v255
    %v414 = vpop.f32.mrf.mxu0
    %v415 = vadd.f32 %v355, %v414
    %v416 = vpop.f32.mrf.mxu0
    %417 = vdwg.mxu0
    %v418 = vmax.f32 %v415, 0.0
    %v419 = vand.u32 2147483647, %v415
    %v420 = vsub.f32 0.0, %v419
    %v421 = vmul.f32 %v420, 1.442695
    %v422 = vpow.pop %v421
    %v423 = vadd.f32 %v422, 1.0
    %v424 = vlog2.pop %v423
    %v425 = vmul.f32 %v424, 0.6931472
    %v426 = vmul.f32 -0.5, %v422
    %v427 = vadd.f32 %v426, 1.0
    %v428 = vmul.f32 %v427, %v422
    %v429 = vand.u32 2147483647, %v422
    %vm430 = vcmp.lt.f32.partialorder %v429, 0.0004427343
    %v431 = vsel %vm430, %v428, %v425
    %v432 = vadd.f32 %v418, %v431
    %v433 = vld [vmem:[#allocation11] sm:$0xff]
    %v434 = vmul.f32 %v433, %v432
    %v435 = vadd.f32 %v434, %v334
    %436 = vst [vmem:[#allocation13] sm:$0xff] %v435
    %437 = vst [vmem:[#allocation14] sm:$0xff] %v334
    %438 = vst [vmem:[#allocation16] sm:$0xff] %v432
    // Predicated region
    $region58: #{tpu_custom_call.1} parent=1 // pred_check
      _
    $region59: #{tpu_custom_call.1} parent=1 // pred_check_branch
      %440 = sbr.rel (0) target = $region61
    $region60: #{tpu_custom_call.1} parent=1 // pred_region
      %442 = vsyncadd [#allocation4], 0
      %s444 = sshll.u32 [#allocation13], 4
      %s445 = int_to_ptr.vmem [resolvable:$true] %s444
      %s446 = sshll.u32 %s8, 4
      %s447 = int_to_ptr.hbm [resolvable:$true] %s446
      %449 = dma.vmem_to_hbm [thread:$0]  %s445, 128, %s447, [#allocation4]
    $region61: #{tpu_custom_call.1} parent=1 // pred_fallthru
      _
    // Predicated region
    $region62: #{tpu_custom_call.1} parent=1 // pred_check
      _
    $region63: #{tpu_custom_call.1} parent=1 // pred_check_branch
      %451 = sbr.rel (0) target = $region65
    $region64: #{tpu_custom_call.1} parent=1 // pred_region
      %453 = vsyncadd [#allocation15], 0
      %s455 = sshll.u32 [#allocation14], 4
      %s456 = int_to_ptr.vmem [resolvable:$true] %s455
      %s457 = sshll.u32 %s9, 4
      %s458 = int_to_ptr.hbm [resolvable:$true] %s457
      %460 = dma.vmem_to_hbm [thread:$0]  %s456, 128, %s458, [#allocation15]
    $region65: #{tpu_custom_call.1} parent=1 // pred_fallthru
      _
    // Predicated region
    $region66: #{tpu_custom_call.1} parent=1 // pred_check
      _
    $region67: #{tpu_custom_call.1} parent=1 // pred_check_branch
      %462 = sbr.rel (0) target = $region69
    $region68: #{tpu_custom_call.1} parent=1 // pred_region
      %464 = vsyncadd [#allocation15], 0
      %s466 = sshll.u32 [#allocation16], 4
      %s467 = int_to_ptr.vmem [resolvable:$true] %s466
      %s468 = sshll.u32 %s10, 4
      %s469 = int_to_ptr.hbm [resolvable:$true] %s468
      %471 = dma.vmem_to_hbm [thread:$0]  %s467, 128, %s469, [#allocation15]
    $region69: #{tpu_custom_call.1} parent=1 // pred_fallthru
      _
    // Predicated region
    $region70: #{tpu_custom_call.1} parent=1 // pred_check
      _
    $region71: #{tpu_custom_call.1} parent=1 // pred_check_branch
      %473 = sbr.rel (0) target = $region73
    $region72: #{tpu_custom_call.1} parent=1 // pred_region
      %475 = dma.done [#allocation4], 128
    $region73: #{tpu_custom_call.1} parent=1 // pred_fallthru
      _
    // Predicated region
    $region74: #{tpu_custom_call.1} parent=1 // pred_check
      _
    $region75: #{tpu_custom_call.1} parent=1 // pred_check_branch
      %477 = sbr.rel (0) target = $region77
    $region76: #{tpu_custom_call.1} parent=1 // pred_region
      %479 = dma.done [#allocation15], 128
    $region77: #{tpu_custom_call.1} parent=1 // pred_fallthru
      _
    // Predicated region
    $region78: #{tpu_custom_call.1} parent=1 // pred_check
      _
    $region79: #{tpu_custom_call.1} parent=1 // pred_check_branch
      %481 = sbr.rel (0) target = $region81
    $region80: #{tpu_custom_call.1} parent=1 // pred_region
      %483 = dma.done [#allocation15], 128
    $region81: #{tpu_custom_call.1} parent=1 // pred_fallthru
      _
    %484 = vsyncpa [#allocation3], 1
    %485 = vsyncpa [#allocation6], 1
    %486 = vsyncpa [#allocation9], 1
    %487 = vsyncpa [#allocation12], 1
    %488 = vsyncpa [#allocation4], 1
    %489 = vsyncpa [#allocation15], 1

</llo_original>
